<compile_context>
chip_gen: v5e
topology: v5e:2x2
jax: 0.10.0
libtpu: 0.0.40
codegen_flags: <defaults>
</compile_context>

<pallas_src>
import functools

import jax
import jax.numpy as jnp
from jax.experimental import pallas as pl
from jax.experimental.pallas import tpu as pltpu

EPS = 1e-12   # F.normalize default eps
_LANE = 128


def _round_up(x, m):
    return -(-x // m) * m


def _vq_kernel(z_ref, code_ref, idx_ref, sse_ref, zb_ref, max_ref, arg_ref):
    """Grid = (m_tiles, n_tiles); M axis parallel, N (codebook) axis arbitrary/last.

    z_ref:    (tile_m//r, r*d)  lane-dense slab of flattened z (resident across N)
    code_ref: (tile_n, d)       bf16 L2-normalized codebook tile (streamed over N)
    idx_ref:  (1, 1, tile_m)    int32 winning code index (permuted row order, lane-dense)
    sse_ref:  (1, 1, 128)       f32 per-M-tile partial sum of ||z - c_win||^2
    zb_ref:   (tile_m, d)       bf16 scratch: unpacked z rows, built once per M tile
    max_ref:  (tile_m, 1)       f32 running best score  z . c
    arg_ref:  (tile_m, 1)       int32 running best global code index
    """
    tile_n, d = code_ref.shape
    tile_m = zb_ref.shape[0]
    r = z_ref.shape[1] // d          # lane-grouping factor of the z slab
    sub = tile_m // r

    n = pl.program_id(1)

    @pl.when(n == 0)
    def _init():
        zw = z_ref[...]                                   # (sub, r*d), native dtype
        # Unpack the lane-dense slab into (tile_m, d) rows, permuted so that
        # kernel row q*sub + p  <->  original in-tile row r*p + q, and cast to
        # bf16 once; reused by every codebook step.
        for q in range(r):
            zb_ref[pl.ds(q * sub, sub), :] = (
                zw[:, q * d:(q + 1) * d].astype(jnp.bfloat16))
        max_ref[...] = jnp.full_like(max_ref, -jnp.inf)
        arg_ref[...] = jnp.zeros_like(arg_ref)

    # With unit-norm codes, argmin ||z_n - c||^2 == argmax (z . c), and the
    # positive per-row scale of z-normalization cannot change the argmax, so raw
    # z feeds the MXU (bf16 operands, f32 accumulation).
    zc = jax.lax.dot_general(
        zb_ref[...], code_ref[...],
        dimension_numbers=(((1,), (1,)), ((), ())),       # (tile_m, tile_n)
        preferred_element_type=jnp.float32)
    tile_max = jnp.max(zc, axis=-1, keepdims=True)        # (tile_m, 1)
    tile_arg = jnp.argmax(zc, axis=-1).astype(jnp.int32)[:, None]
    better = tile_max > max_ref[...]                      # strict > keeps first occurrence
    max_ref[...] = jnp.where(better, tile_max, max_ref[...])
    arg_ref[...] = jnp.where(better, tile_arg + n * tile_n, arg_ref[...])

    @pl.when(n == pl.num_programs(1) - 1)
    def _finalize():
        idx_ref[...] = arg_ref[...][:, 0][None, None, :]
        # sum_rows ||z - c_win||^2 = sum(z^2) + tile_m * ||c||^2 - 2 * sum(best z.c);
        # sum(z^2) is layout-free so it is taken straight off the wide slab in f32.
        zw = z_ref[...].astype(jnp.float32)
        zsq = jnp.sum(jnp.sum(zw * zw, axis=1, keepdims=True), axis=0, keepdims=True)
        best = jnp.sum(max_ref[...], axis=0, keepdims=True)
        sse = zsq + float(tile_m) - 2.0 * best            # (1, 1)
        sse_ref[...] = jnp.broadcast_to(sse, (1, _LANE))[None, :, :]


def _vmem_limit_bytes(tile_m, r, d, tile_n, z_itemsize):
    pad = lambda x: _round_up(x, _LANE)
    b = 0
    b += 2 * (tile_m // r) * pad(r * d) * z_itemsize      # z slab (double-buffered)
    b += 2 * tile_n * pad(d) * 2                          # codebook tile bf16 (double-buffered)
    b += tile_m * pad(d) * 2                              # zb scratch
    b += 2 * tile_m * _LANE * 4                           # max/arg carries (lane-padded)
    b += 2 * 2 * 8 * pad(tile_m) * 4                      # idx/sse output blocks
    b += 2 * tile_m * pad(tile_n) * 4                     # zc logits + select temporaries
    est = int(b * 1.5) + (4 << 20)                        # headroom for compiler temporaries
    try:
        phys = pltpu.get_tpu_info().vmem_capacity_bytes   # 128 MiB v5e/v6e, 64 MiB v7x
    except Exception:  # noqa: BLE001 - fall back to the smallest generation
        phys = 64 << 20
    return max(32 << 20, min(est, int(phys * 0.9)))


def vq_forward(z, code, beta, legacy=True, *, tile_m=512):
    """Forward pass of VectorQuantizeSimple.

    Returns (z_q, loss, (None, None, min_encoding_indices)).
    """
    orig_shape = z.shape
    n_e, e_dim = code.shape
    assert z.shape[-1] == e_dim
    m = 1
    for s in z.shape[:-1]:
        m *= s

    # ---- tiling choices ---------------------------------------------------
    # Lane-grouping factor: present z to the kernel as (M/r, r*e_dim) slabs with
    # a lane-dense last dim (unmasked DMA, 1/4 the VMEM of a (tile_m, 32) block).
    r = _LANE // e_dim if (e_dim < _LANE and _LANE % e_dim == 0) else 1
    tile_m = min(tile_m, m)
    # Give each TensorCore several grid steps so the z-slab DMA pipelines behind
    # the MXU work (8 M tiles for the M=1024 example -> 4 per core on v7x).
    while tile_m > 128 and m // tile_m < 8:
        tile_m //= 2
    tile_m = max(tile_m, 8 * r)
    # TODO(synk): pad + pl.when-mask a remainder tile so arbitrary M is supported.
    assert m % tile_m == 0 and tile_m % r == 0, "M must be a multiple of tile_m"
    num_m_tiles = m // tile_m

    # Codebook: L2-normalize ONCE in f32 (hoisted), pad n_e to the MXU width with
    # duplicates of row 0 (first-occurrence ties -> padded rows can never win),
    # stream over the inner N grid axis in bf16.
    code_f32 = code.astype(jnp.float32)
    c_norm = code_f32 / jnp.maximum(
        jnp.sqrt(jnp.sum(code_f32 * code_f32, axis=-1, keepdims=True)), EPS)
    tile_n = 256 if n_e > 128 else 128
    n_pad = _round_up(n_e, tile_n)
    if n_pad > n_e:
        c_pad = jnp.concatenate(
            [c_norm, jnp.broadcast_to(c_norm[:1], (n_pad - n_e, e_dim))], axis=0)
    else:
        c_pad = c_norm
    num_n_tiles = n_pad // tile_n

    z_wide = z.reshape(m // r, r * e_dim)     # pure reshape of contiguous data

    cost = pl.CostEstimate(
        flops=2 * m * n_pad * e_dim,
        transcendentals=0,
        bytes_accessed=(m * e_dim * z.dtype.itemsize          # z in
                        + num_m_tiles * n_pad * e_dim * 2      # codebook re-streamed per M tile
                        + num_m_tiles * tile_m * 4             # indices out
                        + num_m_tiles * _LANE * 4))            # sse partials out

    kernel = pl.pallas_call(
        _vq_kernel,
        out_shape=(
            jax.ShapeDtypeStruct((num_m_tiles, 1, tile_m), jnp.int32),   # winning indices
            jax.ShapeDtypeStruct((num_m_tiles, 1, _LANE), jnp.float32),  # per-tile SSE partials
        ),
        grid_spec=pltpu.PrefetchScalarGridSpec(
            num_scalar_prefetch=0,
            grid=(num_m_tiles, num_n_tiles),
            in_specs=[
                pl.BlockSpec((tile_m // r, r * e_dim), lambda i, n: (i, 0)),  # z slab (resident over N)
                pl.BlockSpec((tile_n, e_dim), lambda i, n: (n, 0)),           # codebook stream
            ],
            out_specs=[
                pl.BlockSpec((1, 1, tile_m), lambda i, n: (i, 0, 0)),
                pl.BlockSpec((1, 1, _LANE), lambda i, n: (i, 0, 0)),
            ],
            scratch_shapes=[
                pltpu.VMEM((tile_m, e_dim), jnp.bfloat16),   # unpacked bf16 z rows
                pltpu.VMEM((tile_m, 1), jnp.float32),        # running best score
                pltpu.VMEM((tile_m, 1), jnp.int32),          # running best index
            ]),
        compiler_params=pltpu.CompilerParams(
            dimension_semantics=("parallel", "arbitrary"),
            vmem_limit_bytes=_vmem_limit_bytes(tile_m, r, e_dim, tile_n,
                                               z.dtype.itemsize)),
        cost_estimate=cost,
    )
    idx_perm, sse_part = kernel(z_wide, c_pad.astype(jnp.bfloat16))

    # Undo the in-tile row permutation introduced by the lane-dense z slabs.
    idx = idx_perm.reshape(num_m_tiles, r, tile_m // r)
    idx = jnp.transpose(idx, (0, 2, 1)).reshape(m)

    # Embedding lookup outside the kernel: exact f32-normalized rows, and avoids a
    # second full M*N*D one-hot matmul on the MXU just to gather winning rows.
    z_q = jnp.take(c_pad, idx, axis=0).astype(z.dtype).reshape(orig_shape)

    mse = jnp.sum(sse_part[:, 0, 0]) / (m * e_dim)
    # Forward value only: detach() affects gradients, so both MSE terms are
    # numerically identical here; legacy / non-legacy give the same loss value.
    loss = (mse + beta * mse) if legacy else (beta * mse + mse)
    # TODO(synk): straight-through estimator + detach-asymmetric loss need a custom_vjp.
    return z_q, loss, (None, None, idx)   # z + (z_q - z).detach() == z_q in value


if __name__ == "__main__":
    n_e, e_dim, beta = 64, 32, 0.25
    B, H, W = 2, 16, 32   # M = B*H*W = 1024 rows -> 8 M tiles of 128 rows

    key = jax.random.PRNGKey(0)
    k_code, k_z = jax.random.split(key)

    # Deterministic params mimicking nn.Parameter(randn).uniform_(-1/n_e, 1/n_e)
    code = jax.random.uniform(k_code, (n_e, e_dim), dtype=jnp.float32,
                              minval=-1.0 / n_e, maxval=1.0 / n_e)
    z = jax.random.normal(k_z, (B, H, W, e_dim), dtype=jnp.float32)

    fwd = jax.jit(functools.partial(vq_forward, beta=beta, legacy=True))
    z_q, loss, (_, _, indices) = fwd(z, code)
    jax.block_until_ready((z_q, loss, indices))

    # Shape / dtype contract of the PyTorch module.
    assert z_q.shape == z.shape and z_q.dtype == z.dtype
    assert indices.shape == (B * H * W,)
    assert loss.shape == ()

    # Numerical sanity check vs a pure-JAX f32 reference. bf16 MXU operands can
    # legitimately flip near-tie indices, so compare a match fraction and a loose
    # loss tolerance rather than exact equality.
    zf = z.reshape(-1, e_dim)
    zf_n = zf / jnp.maximum(jnp.linalg.norm(zf, axis=-1, keepdims=True), EPS)
    c_n = code / jnp.maximum(jnp.linalg.norm(code, axis=-1, keepdims=True), EPS)
    d = (jnp.sum(zf_n ** 2, axis=1, keepdims=True) + jnp.sum(c_n ** 2, axis=1)
         - 2.0 * zf_n @ c_n.T)
    ref_idx = jnp.argmin(d, axis=1)
    ref_mse = jnp.mean((c_n[ref_idx] - zf) ** 2)
    ref_loss = ref_mse + beta * ref_mse
    match = float(jnp.mean((indices == ref_idx).astype(jnp.float32)))
    assert match > 0.99, match
    assert abs(float(loss) - float(ref_loss)) < 2e-2 * max(1.0, abs(float(ref_loss))), (
        float(loss), float(ref_loss))
    # z_q rows are exact f32-normalized codebook entries for the chosen indices.
    assert bool(jnp.allclose(z_q.reshape(-1, e_dim), c_n[indices], atol=1e-5))

    print("KERNEL_OK")
</pallas_src>

<mosaic_0001>
module attributes {stable_mosaic.version = 11 : i64} {
  func.func @_vq_kernel(%arg0: i32, %arg1: i32, %arg2: memref<32x128xf32, #tpu.memory_space<vmem>>, %arg3: memref<128x32xbf16, #tpu.memory_space<vmem>>, %arg4: memref<1x1x128xi32, #tpu.memory_space<vmem>>, %arg5: memref<1x1x128xf32, #tpu.memory_space<vmem>>, %arg6: memref<128x32xbf16, #tpu.memory_space<vmem>>, %arg7: memref<128x1xf32, #tpu.memory_space<vmem>>, %arg8: memref<128x1xi32, #tpu.memory_space<vmem>>) attributes {dimension_semantics = [#tpu.dimension_semantics<parallel>, #tpu.dimension_semantics<arbitrary>], iteration_bounds = array<i64: 8, 1>, scalar_prefetch = 0 : i64, scratch_operands = 3 : i64, tpu.core_type = #tpu.core_type<tc>, window_params = [{transform_indices = @transform_0, window_bounds = array<i64: 32, 128>}, {transform_indices = @transform_1, window_bounds = array<i64: 128, 32>}, {transform_indices = @transform_2, window_bounds = array<i64: 1, 1, 128>}, {transform_indices = @transform_3, window_bounds = array<i64: 1, 1, 128>}]} {
    %c0_i32 = arith.constant 0 : i32
    %0 = arith.cmpi eq, %arg1, %c0_i32 : i32
    %1 = arith.extui %0 : i1 to i32
    %c0_i32_0 = arith.constant 0 : i32
    %2 = arith.cmpi ne, %1, %c0_i32_0 : i32
    scf.if %2 {
      %c0_17 = arith.constant 0 : index
      %c0_18 = arith.constant 0 : index
      %24 = vector.load %arg2[%c0_17, %c0_18] : memref<32x128xf32, #tpu.memory_space<vmem>>, vector<32x128xf32>
      %25 = vector.extract_strided_slice %24 {offsets = [0, 0], sizes = [32, 32], strides = [1, 1]} : vector<32x128xf32> to vector<32x32xf32>
      %26 = arith.truncf %25 : vector<32x32xf32> to vector<32x32xbf16>
      %c0_19 = arith.constant 0 : index
      %c0_20 = arith.constant 0 : index
      %27 = vector.load %arg6[%c0_19, %c0_20] : memref<128x32xbf16, #tpu.memory_space<vmem>>, vector<32x32xbf16>
      tpu.vector_store %arg6[%c0_19, %c0_20], %26 {strides = array<i32>} : memref<128x32xbf16, #tpu.memory_space<vmem>>, vector<32x32xbf16>,
      %28 = vector.extract_strided_slice %24 {offsets = [0, 32], sizes = [32, 32], strides = [1, 1]} : vector<32x128xf32> to vector<32x32xf32>
      %29 = arith.truncf %28 : vector<32x32xf32> to vector<32x32xbf16>
      %c32 = arith.constant 32 : index
      %c0_21 = arith.constant 0 : index
      %30 = vector.load %arg6[%c32, %c0_21] : memref<128x32xbf16, #tpu.memory_space<vmem>>, vector<32x32xbf16>
      tpu.vector_store %arg6[%c32, %c0_21], %29 {strides = array<i32>} : memref<128x32xbf16, #tpu.memory_space<vmem>>, vector<32x32xbf16>,
      %31 = vector.extract_strided_slice %24 {offsets = [0, 64], sizes = [32, 32], strides = [1, 1]} : vector<32x128xf32> to vector<32x32xf32>
      %32 = arith.truncf %31 : vector<32x32xf32> to vector<32x32xbf16>
      %c64 = arith.constant 64 : index
      %c0_22 = arith.constant 0 : index
      %33 = vector.load %arg6[%c64, %c0_22] : memref<128x32xbf16, #tpu.memory_space<vmem>>, vector<32x32xbf16>
      tpu.vector_store %arg6[%c64, %c0_22], %32 {strides = array<i32>} : memref<128x32xbf16, #tpu.memory_space<vmem>>, vector<32x32xbf16>,
      %34 = vector.extract_strided_slice %24 {offsets = [0, 96], sizes = [32, 32], strides = [1, 1]} : vector<32x128xf32> to vector<32x32xf32>
      %35 = arith.truncf %34 : vector<32x32xf32> to vector<32x32xbf16>
      %c96 = arith.constant 96 : index
      %c0_23 = arith.constant 0 : index
      %36 = vector.load %arg6[%c96, %c0_23] : memref<128x32xbf16, #tpu.memory_space<vmem>>, vector<32x32xbf16>
      tpu.vector_store %arg6[%c96, %c0_23], %35 {strides = array<i32>} : memref<128x32xbf16, #tpu.memory_space<vmem>>, vector<32x32xbf16>,
      %cst_24 = arith.constant 0xFF800000 : f32
      %37 = vector.broadcast %cst_24 : f32 to vector<128x1xf32>
      %c0_25 = arith.constant 0 : index
      %c0_26 = arith.constant 0 : index
      %38 = vector.load %arg7[%c0_25, %c0_26] : memref<128x1xf32, #tpu.memory_space<vmem>>, vector<128x1xf32>
      tpu.vector_store %arg7[%c0_25, %c0_26], %37 {strides = array<i32>} : memref<128x1xf32, #tpu.memory_space<vmem>>, vector<128x1xf32>,
      %c0_i32_27 = arith.constant 0 : i32
      %39 = vector.broadcast %c0_i32_27 : i32 to vector<128x1xi32>
      %c0_28 = arith.constant 0 : index
      %c0_29 = arith.constant 0 : index
      %40 = vector.load %arg8[%c0_28, %c0_29] : memref<128x1xi32, #tpu.memory_space<vmem>>, vector<128x1xi32>
      tpu.vector_store %arg8[%c0_28, %c0_29], %39 {strides = array<i32>} : memref<128x1xi32, #tpu.memory_space<vmem>>, vector<128x1xi32>,
    } else {
    }
    %c0 = arith.constant 0 : index
    %c0_1 = arith.constant 0 : index
    %3 = vector.load %arg6[%c0, %c0_1] : memref<128x32xbf16, #tpu.memory_space<vmem>>, vector<128x32xbf16>
    %c0_2 = arith.constant 0 : index
    %c0_3 = arith.constant 0 : index
    %4 = vector.load %arg3[%c0_2, %c0_3] : memref<128x32xbf16, #tpu.memory_space<vmem>>, vector<128x32xbf16>
    %cst = arith.constant dense<0.000000e+00> : vector<128x128xf32>
    %5 = tpu.matmul %3, %4, %cst {dimension_numbers = #tpu.dot_dimension_numbers<[1], [1], [0], [0], [0, 0, 1, 0], [], []>} : vector<128x32xbf16>, vector<128x32xbf16>, vector<128x128xf32> -> vector<128x128xf32>
    %cst_4 = arith.constant dense<0xFF800000> : vector<128xf32>
    %6 = vector.multi_reduction <maximumf>, %5, %cst_4 [1] : vector<128x128xf32> to vector<128xf32>
    %7 = vector.shape_cast %6 : vector<128xf32> to vector<128x1xf32>
    %8 = tpu.reduce_index %5 {axis = 1 : i32, kind = #tpu.reduction_kind<arg_max>} : vector<128x128xf32> -> vector<128xi32>
    %9 = vector.shape_cast %8 : vector<128xi32> to vector<128x1xi32>
    %c0_5 = arith.constant 0 : index
    %c0_6 = arith.constant 0 : index
    %10 = vector.load %arg7[%c0_5, %c0_6] : memref<128x1xf32, #tpu.memory_space<vmem>>, vector<128x1xf32>
    %11 = arith.cmpf ogt, %7, %10 : vector<128x1xf32>
    %c0_7 = arith.constant 0 : index
    %c0_8 = arith.constant 0 : index
    %12 = vector.load %arg7[%c0_7, %c0_8] : memref<128x1xf32, #tpu.memory_space<vmem>>, vector<128x1xf32>
    %13 = arith.select %11, %7, %12 : vector<128x1xi1>, vector<128x1xf32>
    %c0_9 = arith.constant 0 : index
    %c0_10 = arith.constant 0 : index
    %14 = vector.load %arg7[%c0_9, %c0_10] : memref<128x1xf32, #tpu.memory_space<vmem>>, vector<128x1xf32>
    tpu.vector_store %arg7[%c0_9, %c0_10], %13 {strides = array<i32>} : memref<128x1xf32, #tpu.memory_space<vmem>>, vector<128x1xf32>,
    %c128_i32 = arith.constant 128 : i32
    %15 = arith.muli %arg1, %c128_i32 : i32
    %16 = vector.broadcast %15 : i32 to vector<128x1xi32>
    %17 = arith.addi %9, %16 : vector<128x1xi32>
    %c0_11 = arith.constant 0 : index
    %c0_12 = arith.constant 0 : index
    %18 = vector.load %arg8[%c0_11, %c0_12] : memref<128x1xi32, #tpu.memory_space<vmem>>, vector<128x1xi32>
    %19 = arith.select %11, %17, %18 : vector<128x1xi1>, vector<128x1xi32>
    %c0_13 = arith.constant 0 : index
    %c0_14 = arith.constant 0 : index
    %20 = vector.load %arg8[%c0_13, %c0_14] : memref<128x1xi32, #tpu.memory_space<vmem>>, vector<128x1xi32>
    tpu.vector_store %arg8[%c0_13, %c0_14], %19 {strides = array<i32>} : memref<128x1xi32, #tpu.memory_space<vmem>>, vector<128x1xi32>,
    %c0_i32_15 = arith.constant 0 : i32
    %21 = arith.cmpi eq, %arg1, %c0_i32_15 : i32
    %22 = arith.extui %21 : i1 to i32
    %c0_i32_16 = arith.constant 0 : i32
    %23 = arith.cmpi ne, %22, %c0_i32_16 : i32
    scf.if %23 {
      %c0_17 = arith.constant 0 : index
      %c0_18 = arith.constant 0 : index
      %24 = vector.load %arg8[%c0_17, %c0_18] : memref<128x1xi32, #tpu.memory_space<vmem>>, vector<128x1xi32>
      %25 = vector.shape_cast %24 : vector<128x1xi32> to vector<128xi32>
      %26 = vector.shape_cast %25 : vector<128xi32> to vector<1x1x128xi32>
      %c0_19 = arith.constant 0 : index
      %c0_20 = arith.constant 0 : index
      %c0_21 = arith.constant 0 : index
      %27 = vector.load %arg4[%c0_19, %c0_20, %c0_21] : memref<1x1x128xi32, #tpu.memory_space<vmem>>, vector<1x1x128xi32>
      tpu.vector_store %arg4[%c0_19, %c0_20, %c0_21], %26 {strides = array<i32>} : memref<1x1x128xi32, #tpu.memory_space<vmem>>, vector<1x1x128xi32>,
      %c0_22 = arith.constant 0 : index
      %c0_23 = arith.constant 0 : index
      %28 = vector.load %arg2[%c0_22, %c0_23] : memref<32x128xf32, #tpu.memory_space<vmem>>, vector<32x128xf32>
      %29 = arith.mulf %28, %28 : vector<32x128xf32>
      %cst_24 = arith.constant dense<0.000000e+00> : vector<32xf32>
      %30 = vector.multi_reduction <add>, %29, %cst_24 [1] : vector<32x128xf32> to vector<32xf32>
      %31 = vector.shape_cast %30 : vector<32xf32> to vector<32x1xf32>
      %cst_25 = arith.constant dense<0.000000e+00> : vector<1xf32>
      %32 = vector.multi_reduction <add>, %31, %cst_25 [0] : vector<32x1xf32> to vector<1xf32>
      %33 = vector.shape_cast %32 : vector<1xf32> to vector<1x1xf32>
      %c0_26 = arith.constant 0 : index
      %c0_27 = arith.constant 0 : index
      %34 = vector.load %arg7[%c0_26, %c0_27] : memref<128x1xf32, #tpu.memory_space<vmem>>, vector<128x1xf32>
      %cst_28 = arith.constant dense<0.000000e+00> : vector<1xf32>
      %35 = vector.multi_reduction <add>, %34, %cst_28 [0] : vector<128x1xf32> to vector<1xf32>
      %36 = vector.shape_cast %35 : vector<1xf32> to vector<1x1xf32>
      %cst_29 = arith.constant 1.280000e+02 : f32
      %37 = vector.broadcast %cst_29 : f32 to vector<1x1xf32>
      %38 = arith.addf %33, %37 : vector<1x1xf32>
      %cst_30 = arith.constant 2.000000e+00 : f32
      %39 = vector.broadcast %cst_30 : f32 to vector<1x1xf32>
      %40 = arith.mulf %39, %36 : vector<1x1xf32>
      %41 = arith.subf %38, %40 : vector<1x1xf32>
      %42 = vector.shape_cast %41 : vector<1x1xf32> to vector<1x1xf32>
      %43 = vector.broadcast %42 : vector<1x1xf32> to vector<1x128xf32>
      %44 = vector.shape_cast %43 : vector<1x128xf32> to vector<1x1x128xf32>
      %c0_31 = arith.constant 0 : index
      %c0_32 = arith.constant 0 : index
      %c0_33 = arith.constant 0 : index
      %45 = vector.load %arg5[%c0_31, %c0_32, %c0_33] : memref<1x1x128xf32, #tpu.memory_space<vmem>>, vector<1x1x128xf32>
      tpu.vector_store %arg5[%c0_31, %c0_32, %c0_33], %44 {strides = array<i32>} : memref<1x1x128xf32, #tpu.memory_space<vmem>>, vector<1x1x128xf32>,
    } else {
    }
    return
  }
  func.func @transform_0(%arg0: i32, %arg1: i32) -> (i32, i32) {
    %c0_i32 = arith.constant 0 : i32
    %c0_i32_0 = arith.constant 0 : i32
    return %arg0, %c0_i32 : i32, i32
  }
  func.func @transform_1(%arg0: i32, %arg1: i32) -> (i32, i32) {
    %c0_i32 = arith.constant 0 : i32
    %c0_i32_0 = arith.constant 0 : i32
    return %arg1, %c0_i32 : i32, i32
  }
  func.func @transform_2(%arg0: i32, %arg1: i32) -> (i32, i32, i32) {
    %c0_i32 = arith.constant 0 : i32
    %c0_i32_0 = arith.constant 0 : i32
    %c0_i32_1 = arith.constant 0 : i32
    return %arg0, %c0_i32, %c0_i32_0 : i32, i32, i32
  }
  func.func @transform_3(%arg0: i32, %arg1: i32) -> (i32, i32, i32) {
    %c0_i32 = arith.constant 0 : i32
    %c0_i32_0 = arith.constant 0 : i32
    %c0_i32_1 = arith.constant 0 : i32
    return %arg0, %c0_i32, %c0_i32_0 : i32, i32, i32
  }
}

</mosaic_0001>

<llo_original>
// kernel: vq_forward.1
$region0: #{vq_forward.1}
  #allocation0 [shape = 'u32[]', space=smem, size = 0x4, offset = 0x4, fixed_abs, tag = 'smem constant byte address 0x4 - core index']
  #allocation1 [shape = 'u32[72,128]{1,0:T(1,128)}', space=vmem, size = 0x9000, scoped, tag = 'internal scratch']
  #allocation2 [shape = 'bf16[128,32]{1,0:T(8,128)(2,1)}', space=vmem, size = 0x8000, scoped, tag = 'scratch operand']
  #allocation3 [shape = 'f32[128,1]{1,0:T(8,128)}', space=vmem, size = 0x10000, scoped, tag = 'scratch operand']
  #allocation4 [shape = 's32[128,1]{1,0:T(8,128)}', space=vmem, size = 0x10000, scoped, tag = 'scratch operand']
  %s0 = inlined_call_operand.vmem [shape: f32[256,128], index: 0, kind: input, shape index: {}]
  %s1 = inlined_call_operand.vmem [shape: bf16[128,32], index: 1, kind: input, shape index: {}]
  %s2 = inlined_call_operand.vmem [shape: s32[8,1,128], index: 2, kind: output, shape index: {0}]
  %s3 = inlined_call_operand.vmem [shape: f32[8,1,128], index: 3, kind: output, shape index: {1}]
  %4 = xla_tuple %s2, %s3
  %s5 = sld [smem:[#allocation0]]
  $region57: #{vq_forward.1} parent=0
    _
  %s7 = ssub.s32 1, %s5
  %s8 = scalar_select 0, %s7, %s5
  loop: start=0, step=1, limit=10
  $region2: #{vq_forward.1} parent=0 // loop_pre_header
    _
  $region3: #{vq_forward.1} parent=0 // loop_header
    %s10 = sphi 0, %s14
    %p11 = scmp.ge.s32.totalorder %s10, 10
    %s17 = sphi 0, %s29
    %s18 = sphi 0, %s25
    %s19 = sphi 0, %s17
    %s20 = sphi 0, %s18
    %s21 = sphi 0, %s19
    %s22 = sphi 0, %s20
    %s32 = sphi 0, %s34
    %s35 = sphi 0, %s32
    %s36 = sphi 0, %s35
    %s52 = sphi 0, %s36
    %s58 = sphi 0, %s60
    %s61 = sphi 0, %s58
    %s62 = sphi 0, %s61
    %s78 = sphi 0, %s62
    %s84 = sphi 0, %s86
    %s87 = sphi 0, %s84
    %s88 = sphi 0, %s87
    %s104 = sphi 0, %s88
    %s110 = sphi 0, %s112
    %s113 = sphi 0, %s110
    %s114 = sphi 0, %s113
    %s130 = sphi 0, %s114
  $region4: #{vq_forward.1} parent=0 // loop_header_branch
    %13 = sbr.rel (%p11) target = $region8
  $region5: #{vq_forward.1} parent=0 // loop_body
    %s15 = ssub.s32 %s10, 1
    %s16 = ssub.s32 %s10, 2
    %s23 = sadd.s32 1, %s18
    %p24 = scmp.ge.s32.totalorder %s23, 1
    %s25 = scalar_select %p24, 0, %s23
    %s26 = sadd.s32 1, %s17
    %s27 = scalar_select %p24, %s26, %s17
    %p28 = scmp.ge.s32.totalorder %s27, 8
    %s29 = scalar_select %p28, 0, %s27
    %s30 = ssub.s32 %s17, %s29
    %p31 = scmp.eq.s32.totalorder %s30, 0
    %s33 = sadd.s32 %s32, 1
    %s34 = scalar_select %p31, %s32, %s33
    %p37 = pneg %p31
    %p38 = scmp.eq.s32.totalorder %s10, 7
    %p39 = por %p37, %p38
    %p40 = scmp.ne.s32.totalorder %s32, %s35
    %p41 = scmp.eq.s32.totalorder %s10, 0
    %p42 = por %p40, %p41
    %p43 = scmp.ne.s32.totalorder %s32, %s35
    %p44 = scmp.eq.s32.totalorder %s15, 7
    %p45 = por %p43, %p44
    %p46 = scmp.ne.s32.totalorder %s35, %s36
    %p47 = scmp.eq.s32.totalorder %s15, 0
    %p48 = por %p46, %p47
    %p49 = scmp.ne.s32.totalorder %s35, %s36
    %p50 = scmp.eq.s32.totalorder %s16, 7
    %p51 = por %p49, %p50
    %p53 = scmp.ne.s32.totalorder %s36, %s52
    %p54 = scmp.eq.s32.totalorder %s16, 0
    %p55 = por %p53, %p54
    %s56 = ssub.s32 %s18, %s25
    %p57 = scmp.eq.s32.totalorder %s56, 0
    %s59 = sadd.s32 %s58, 1
    %s60 = scalar_select %p57, %s58, %s59
    %p63 = pneg %p57
    %p64 = scmp.eq.s32.totalorder %s10, 7
    %p65 = por %p63, %p64
    %p66 = scmp.ne.s32.totalorder %s58, %s61
    %p67 = scmp.eq.s32.totalorder %s10, 0
    %p68 = por %p66, %p67
    %p69 = scmp.ne.s32.totalorder %s58, %s61
    %p70 = scmp.eq.s32.totalorder %s15, 7
    %p71 = por %p69, %p70
    %p72 = scmp.ne.s32.totalorder %s61, %s62
    %p73 = scmp.eq.s32.totalorder %s15, 0
    %p74 = por %p72, %p73
    %p75 = scmp.ne.s32.totalorder %s61, %s62
    %p76 = scmp.eq.s32.totalorder %s16, 7
    %p77 = por %p75, %p76
    %p79 = scmp.ne.s32.totalorder %s62, %s78
    %p80 = scmp.eq.s32.totalorder %s16, 0
    %p81 = por %p79, %p80
    %s82 = ssub.s32 %s17, %s29
    %p83 = scmp.eq.s32.totalorder %s82, 0
    %s85 = sadd.s32 %s84, 1
    %s86 = scalar_select %p83, %s84, %s85
    %p89 = pneg %p83
    %p90 = scmp.eq.s32.totalorder %s10, 7
    %p91 = por %p89, %p90
    %p92 = scmp.ne.s32.totalorder %s84, %s87
    %p93 = scmp.eq.s32.totalorder %s10, 0
    %p94 = por %p92, %p93
    %p95 = scmp.ne.s32.totalorder %s84, %s87
    %p96 = scmp.eq.s32.totalorder %s15, 7
    %p97 = por %p95, %p96
    %p98 = scmp.ne.s32.totalorder %s87, %s88
    %p99 = scmp.eq.s32.totalorder %s15, 0
    %p100 = por %p98, %p99
    %p101 = scmp.ne.s32.totalorder %s87, %s88
    %p102 = scmp.eq.s32.totalorder %s16, 7
    %p103 = por %p101, %p102
    %p105 = scmp.ne.s32.totalorder %s88, %s104
    %p106 = scmp.eq.s32.totalorder %s16, 0
    %p107 = por %p105, %p106
    %s108 = ssub.s32 %s17, %s29
    %p109 = scmp.eq.s32.totalorder %s108, 0
    %s111 = sadd.s32 %s110, 1
    %s112 = scalar_select %p109, %s110, %s111
    %p115 = pneg %p109
    %p116 = scmp.eq.s32.totalorder %s10, 7
    %p117 = por %p115, %p116
    %p118 = scmp.ne.s32.totalorder %s110, %s113
    %p119 = scmp.eq.s32.totalorder %s10, 0
    %p120 = por %p118, %p119
    %p121 = scmp.ne.s32.totalorder %s110, %s113
    %p122 = scmp.eq.s32.totalorder %s15, 7
    %p123 = por %p121, %p122
    %p124 = scmp.ne.s32.totalorder %s113, %s114
    %p125 = scmp.eq.s32.totalorder %s15, 0
    %p126 = por %p124, %p125
    %p127 = scmp.ne.s32.totalorder %s113, %s114
    %p128 = scmp.eq.s32.totalorder %s16, 7
    %p129 = por %p127, %p128
    %p131 = scmp.ne.s32.totalorder %s114, %s130
    %p132 = scmp.eq.s32.totalorder %s16, 0
    %p133 = por %p131, %p132
    %p134 = scmp.le.s32.totalorder 1, %s10
    %p135 = scmp.lt.s32.totalorder %s10, 9
    %p136 = pnand %p134, %p135
    %p137 = pneg %p136
    // Predicated region
    $region9: #{vq_forward.1} parent=5 // pred_check
      _
    $region10: #{vq_forward.1} parent=5 // pred_check_branch
      %139 = sbr.rel (%p136) target = $region12
    $region11: #{vq_forward.1} parent=5 // pred_region
      %s140 = ssub.s32 %s10, 1
      // Predicated region
      $region13: #{vq_forward.1} parent=11 // pred_check
        %p141 = pneg %p74
      $region14: #{vq_forward.1} parent=11 // pred_check_branch
        %143 = sbr.rel (%p141) target = $region16
      $region15: #{vq_forward.1} parent=11 // pred_region
        %s144 = smul.u32 16, %s20
        %p145 = scmp.lt.s32.totalorder %s144, 15
        %s146 = scalar_select %p145, %s144, 15
        %s147 = smul.addr %s146, 4
        %s148 = scalar_lea.vmem %s1, %s147
        %s149 = smul.u32 16, %s20
      $region16: #{vq_forward.1} parent=11 // pred_fallthru
        _
    $region12: #{vq_forward.1} parent=5 // pred_fallthru
      _
    %p150 = scmp.lt.s32.totalorder %s10, 8
    // Predicated region
    $region17: #{vq_forward.1} parent=5 // pred_check
      %p151 = pneg %p150
    $region18: #{vq_forward.1} parent=5 // pred_check_branch
      %153 = sbr.rel (%p151) target = $region20
    $region19: #{vq_forward.1} parent=5 // pred_region
      // Predicated region
      $region21: #{vq_forward.1} parent=19 // pred_check
        %p154 = pneg %p42
      $region22: #{vq_forward.1} parent=19 // pred_check_branch
        %156 = sbr.rel (%p154) target = $region24
      $region23: #{vq_forward.1} parent=19 // pred_region
        %s157 = smul.u32 4, %s17
        %p158 = scmp.lt.s32.totalorder %s157, 31
        %s159 = scalar_select %p158, %s157, 31
        %s160 = smul.addr %s159, 8
        %s161 = scalar_lea.vmem %s0, %s160
        %s162 = smul.u32 4, %s17
      $region24: #{vq_forward.1} parent=19 // pred_fallthru
        _
    $region20: #{vq_forward.1} parent=5 // pred_fallthru
      _
    %p163 = scmp.le.s32.totalorder 1, %s10
    %p164 = scmp.lt.s32.totalorder %s10, 9
    %p165 = pnand %p163, %p164
    %p166 = pneg %p165
    // Predicated region
    $region25: #{vq_forward.1} parent=5 // pred_check
      _
    $region26: #{vq_forward.1} parent=5 // pred_check_branch
      %168 = sbr.rel (%p165) target = $region28
    $region27: #{vq_forward.1} parent=5 // pred_region
      %s169 = ssub.s32 %s10, 1
      %s170 = smul.u32 4, %s19
      %p171 = scmp.lt.s32.totalorder %s170, 31
      %s172 = scalar_select %p171, %s170, 31
      %s173 = smul.addr %s172, 8
      %s174 = scalar_lea.vmem %s0, %s173
      %p175 = pneg %p48
      %p176 = pneg %p45
      %s177 = smul.u32 16, %s20
      %p178 = scmp.lt.s32.totalorder %s177, 15
      %s179 = scalar_select %p178, %s177, 15
      %s180 = smul.addr %s179, 4
      %s181 = scalar_lea.vmem %s1, %s180
      %p182 = pneg %p74
      %p183 = pneg %p71
      %p184 = pneg %p100
      %p185 = pneg %p97
      %p186 = scmp.lt.s32.totalorder %s19, 7
      %s187 = scalar_select %p186, %s19, 7
      %s188 = scalar_lea.vmem %s2, %s187
      %p189 = pneg %p126
      %p190 = pneg %p123
      %p191 = scmp.lt.s32.totalorder %s19, 7
      %s192 = scalar_select %p191, %s19, 7
      %s193 = scalar_lea.vmem %s3, %s192
      %s194 = smul.u32 4, %s19
      %p195 = scmp.lt.s32.totalorder %s194, 31
      %s196 = scalar_select %p195, %s194, 31
      %s197 = smul.addr %s196, 8
      %s198 = scalar_lea.vmem %s0, %s197
      %s199 = smul.u32 4, %s19
      %s200 = smul.u32 16, %s20
      %p201 = scmp.lt.s32.totalorder %s200, 15
      %s202 = scalar_select %p201, %s200, 15
      %s203 = smul.addr %s202, 4
      %s204 = scalar_lea.vmem %s1, %s203
      %s205 = smul.u32 16, %s20
      %p206 = scmp.lt.s32.totalorder %s19, 7
      %s207 = scalar_select %p206, %s19, 7
      %s208 = scalar_lea.vmem %s2, %s207
      %p209 = scmp.lt.s32.totalorder %s19, 7
      %s210 = scalar_select %p209, %s19, 7
      %s211 = scalar_lea.vmem %s3, %s210
      %p212 = scmp.eq.s32.totalorder %s20, 0
      // Predicated region
      $region29: #{vq_forward.1} parent=27 // pred_check
        %p213 = pneg %p212
      $region30: #{vq_forward.1} parent=27 // pred_check_branch
        %215 = sbr.rel (%p213) target = $region32
      $region31: #{vq_forward.1} parent=27 // pred_region
        %v216 = vld [vmem:[%s198] sm:$0xff]
        %v217 = vld [vmem:[%s198 + $0x8] sm:$0xff]
        %v218 = vld [vmem:[%s198 + $0x10] sm:$0xff]
        %v219 = vld [vmem:[%s198 + $0x18] sm:$0xff]
        %v220 = vpack.c.bf16 %v216, %v216
        %v221 = vpack.c.bf16 %v217, %v217
        %v222 = vpack.c.bf16 %v218, %v218
        %v223 = vpack.c.bf16 %v219, %v219
        %vm224 = vcmask 257024
        %225 = vst.msk [vmem:[#allocation2] sm:$0xf] %vm224, %v220
        %226 = vst.msk [vmem:[#allocation2 + $0x4] sm:$0xf] %vm224, %v221
        %227 = vst.msk [vmem:[#allocation2 + $0x8] sm:$0xf] %vm224, %v222
        %228 = vst.msk [vmem:[#allocation2 + $0xc] sm:$0xf] %vm224, %v223
        %233 = vrot.lane.b32.xlu0 %v220, 96
        %v234 = vpop.permute.xlu0 %233
        %235 = vrot.lane.b32.xlu0 %v221, 96
        %v236 = vpop.permute.xlu0 %235
        %237 = vrot.lane.b32.xlu0 %v222, 96
        %v238 = vpop.permute.xlu0 %237
        %239 = vrot.lane.b32.xlu0 %v223, 96
        %v240 = vpop.permute.xlu0 %239
        %245 = vst.msk [vmem:[#allocation2 + $0x10] sm:$0xf] %vm224, %v234
        %246 = vst.msk [vmem:[#allocation2 + $0x14] sm:$0xf] %vm224, %v236
        %247 = vst.msk [vmem:[#allocation2 + $0x18] sm:$0xf] %vm224, %v238
        %248 = vst.msk [vmem:[#allocation2 + $0x1c] sm:$0xf] %vm224, %v240
        %249 = vrot.lane.b32.xlu0 %v220, 64
        %v250 = vpop.permute.xlu0 %249
        %251 = vrot.lane.b32.xlu0 %v221, 64
        %v252 = vpop.permute.xlu0 %251
        %253 = vrot.lane.b32.xlu0 %v222, 64
        %v254 = vpop.permute.xlu0 %253
        %255 = vrot.lane.b32.xlu0 %v223, 64
        %v256 = vpop.permute.xlu0 %255
        %261 = vst.msk [vmem:[#allocation2 + $0x20] sm:$0xf] %vm224, %v250
        %262 = vst.msk [vmem:[#allocation2 + $0x24] sm:$0xf] %vm224, %v252
        %263 = vst.msk [vmem:[#allocation2 + $0x28] sm:$0xf] %vm224, %v254
        %264 = vst.msk [vmem:[#allocation2 + $0x2c] sm:$0xf] %vm224, %v256
        %265 = vrot.lane.b32.xlu0 %v220, 32
        %v266 = vpop.permute.xlu0 %265
        %267 = vrot.lane.b32.xlu0 %v221, 32
        %v268 = vpop.permute.xlu0 %267
        %269 = vrot.lane.b32.xlu0 %v222, 32
        %v270 = vpop.permute.xlu0 %269
        %271 = vrot.lane.b32.xlu0 %v223, 32
        %v272 = vpop.permute.xlu0 %271
        %277 = vst.msk [vmem:[#allocation2 + $0x30] sm:$0xf] %vm224, %v266
        %278 = vst.msk [vmem:[#allocation2 + $0x34] sm:$0xf] %vm224, %v268
        %279 = vst.msk [vmem:[#allocation2 + $0x38] sm:$0xf] %vm224, %v270
        %280 = vst.msk [vmem:[#allocation2 + $0x3c] sm:$0xf] %vm224, %v272
        %vm281 = vcmask 7168
        %282 = vst.msk [vmem:[#allocation3] sm:$0xff] %vm281, -inf
        %283 = vst.msk [vmem:[#allocation3 + $0x8] sm:$0xff] %vm281, -inf
        %284 = vst.msk [vmem:[#allocation3 + $0x10] sm:$0xff] %vm281, -inf
        %285 = vst.msk [vmem:[#allocation3 + $0x18] sm:$0xff] %vm281, -inf
        %286 = vst.msk [vmem:[#allocation3 + $0x20] sm:$0xff] %vm281, -inf
        %287 = vst.msk [vmem:[#allocation3 + $0x28] sm:$0xff] %vm281, -inf
        %288 = vst.msk [vmem:[#allocation3 + $0x30] sm:$0xff] %vm281, -inf
        %289 = vst.msk [vmem:[#allocation3 + $0x38] sm:$0xff] %vm281, -inf
        %290 = vst.msk [vmem:[#allocation3 + $0x40] sm:$0xff] %vm281, -inf
        %291 = vst.msk [vmem:[#allocation3 + $0x48] sm:$0xff] %vm281, -inf
        %292 = vst.msk [vmem:[#allocation3 + $0x50] sm:$0xff] %vm281, -inf
        %293 = vst.msk [vmem:[#allocation3 + $0x58] sm:$0xff] %vm281, -inf
        %294 = vst.msk [vmem:[#allocation3 + $0x60] sm:$0xff] %vm281, -inf
        %295 = vst.msk [vmem:[#allocation3 + $0x68] sm:$0xff] %vm281, -inf
        %296 = vst.msk [vmem:[#allocation3 + $0x70] sm:$0xff] %vm281, -inf
        %297 = vst.msk [vmem:[#allocation3 + $0x78] sm:$0xff] %vm281, -inf
        %298 = vst.msk [vmem:[#allocation4] sm:$0xff] %vm281, 0
        %299 = vst.msk [vmem:[#allocation4 + $0x8] sm:$0xff] %vm281, 0
        %300 = vst.msk [vmem:[#allocation4 + $0x10] sm:$0xff] %vm281, 0
        %301 = vst.msk [vmem:[#allocation4 + $0x18] sm:$0xff] %vm281, 0
        %302 = vst.msk [vmem:[#allocation4 + $0x20] sm:$0xff] %vm281, 0
        %303 = vst.msk [vmem:[#allocation4 + $0x28] sm:$0xff] %vm281, 0
        %304 = vst.msk [vmem:[#allocation4 + $0x30] sm:$0xff] %vm281, 0
        %305 = vst.msk [vmem:[#allocation4 + $0x38] sm:$0xff] %vm281, 0
        %306 = vst.msk [vmem:[#allocation4 + $0x40] sm:$0xff] %vm281, 0
        %307 = vst.msk [vmem:[#allocation4 + $0x48] sm:$0xff] %vm281, 0
        %308 = vst.msk [vmem:[#allocation4 + $0x50] sm:$0xff] %vm281, 0
        %309 = vst.msk [vmem:[#allocation4 + $0x58] sm:$0xff] %vm281, 0
        %310 = vst.msk [vmem:[#allocation4 + $0x60] sm:$0xff] %vm281, 0
        %311 = vst.msk [vmem:[#allocation4 + $0x68] sm:$0xff] %vm281, 0
        %312 = vst.msk [vmem:[#allocation4 + $0x70] sm:$0xff] %vm281, 0
        %313 = vst.msk [vmem:[#allocation4 + $0x78] sm:$0xff] %vm281, 0
      $region32: #{vq_forward.1} parent=27 // pred_fallthru
        _
      %v314 = vld [vmem:[#allocation2] sm:$0xf]
      %v315 = vld [vmem:[#allocation2 + $0x4] sm:$0xf]
      %v316 = vld [vmem:[#allocation2 + $0x8] sm:$0xf]
      %v317 = vld [vmem:[#allocation2 + $0xc] sm:$0xf]
      %v318 = vld [vmem:[#allocation2 + $0x10] sm:$0xf]
      %v319 = vld [vmem:[#allocation2 + $0x14] sm:$0xf]
      %v320 = vld [vmem:[#allocation2 + $0x18] sm:$0xf]
      %v321 = vld [vmem:[#allocation2 + $0x1c] sm:$0xf]
      %v322 = vld [vmem:[#allocation2 + $0x20] sm:$0xf]
      %v323 = vld [vmem:[#allocation2 + $0x24] sm:$0xf]
      %v324 = vld [vmem:[#allocation2 + $0x28] sm:$0xf]
      %v325 = vld [vmem:[#allocation2 + $0x2c] sm:$0xf]
      %v326 = vld [vmem:[#allocation2 + $0x30] sm:$0xf]
      %v327 = vld [vmem:[#allocation2 + $0x34] sm:$0xf]
      %v328 = vld [vmem:[#allocation2 + $0x38] sm:$0xf]
      %v329 = vld [vmem:[#allocation2 + $0x3c] sm:$0xf]
      %v330 = vld [vmem:[%s204] sm:$0xf]
      %v331 = vld [vmem:[%s204 + $0x4] sm:$0xf]
      %v332 = vld [vmem:[%s204 + $0x8] sm:$0xf]
      %v333 = vld [vmem:[%s204 + $0xc] sm:$0xf]
      %v334 = vld [vmem:[%s204 + $0x10] sm:$0xf]
      %v335 = vld [vmem:[%s204 + $0x14] sm:$0xf]
      %v336 = vld [vmem:[%s204 + $0x18] sm:$0xf]
      %v337 = vld [vmem:[%s204 + $0x1c] sm:$0xf]
      %v338 = vld [vmem:[%s204 + $0x20] sm:$0xf]
      %v339 = vld [vmem:[%s204 + $0x24] sm:$0xf]
      %v340 = vld [vmem:[%s204 + $0x28] sm:$0xf]
      %v341 = vld [vmem:[%s204 + $0x2c] sm:$0xf]
      %v342 = vld [vmem:[%s204 + $0x30] sm:$0xf]
      %v343 = vld [vmem:[%s204 + $0x34] sm:$0xf]
      %v344 = vld [vmem:[%s204 + $0x38] sm:$0xf]
      %v345 = vld [vmem:[%s204 + $0x3c] sm:$0xf]
      %v362 = vunpack.c.l.b16 %v314
      %v363 = vunpack.c.l.b16 %v315
      %v364 = vunpack.c.l.b16 %v316
      %v365 = vunpack.c.l.b16 %v317
      %v366 = vunpack.c.l.b16 %v318
      %v367 = vunpack.c.l.b16 %v319
      %v368 = vunpack.c.l.b16 %v320
      %v369 = vunpack.c.l.b16 %v321
      %v370 = vunpack.c.l.b16 %v322
      %v371 = vunpack.c.l.b16 %v323
      %v372 = vunpack.c.l.b16 %v324
      %v373 = vunpack.c.l.b16 %v325
      %v374 = vunpack.c.l.b16 %v326
      %v375 = vunpack.c.l.b16 %v327
      %v376 = vunpack.c.l.b16 %v328
      %v377 = vunpack.c.l.b16 %v329
      %v378 = vpack.c.b16 %v363, %v362
      %v379 = vpack.c.b16 %v365, %v364
      %v380 = vpack.c.b16 %v367, %v366
      %v381 = vpack.c.b16 %v369, %v368
      %v382 = vpack.c.b16 %v371, %v370
      %v383 = vpack.c.b16 %v373, %v372
      %v384 = vpack.c.b16 %v375, %v374
      %v385 = vpack.c.b16 %v377, %v376
      %v402 = vunpack.c.l.b16 %v330
      %v403 = vunpack.c.l.b16 %v331
      %v404 = vunpack.c.l.b16 %v332
      %v405 = vunpack.c.l.b16 %v333
      %v406 = vunpack.c.l.b16 %v334
      %v407 = vunpack.c.l.b16 %v335
      %v408 = vunpack.c.l.b16 %v336
      %v409 = vunpack.c.l.b16 %v337
      %v410 = vunpack.c.l.b16 %v338
      %v411 = vunpack.c.l.b16 %v339
      %v412 = vunpack.c.l.b16 %v340
      %v413 = vunpack.c.l.b16 %v341
      %v414 = vunpack.c.l.b16 %v342
      %v415 = vunpack.c.l.b16 %v343
      %v416 = vunpack.c.l.b16 %v344
      %v417 = vunpack.c.l.b16 %v345
      %v418 = vpack.c.b16 %v403, %v402
      %v419 = vpack.c.b16 %v405, %v404
      %v420 = vpack.c.b16 %v407, %v406
      %v421 = vpack.c.b16 %v409, %v408
      %v422 = vpack.c.b16 %v411, %v410
      %v423 = vpack.c.b16 %v413, %v412
      %v424 = vpack.c.b16 %v415, %v414
      %v425 = vpack.c.b16 %v417, %v416
      %vm426 = vcmask 261120
      %v428 = vsel %vm426, %v378, 0
      %v431 = vsel %vm426, %v379, 0
      %v434 = vsel %vm426, %v380, 0
      %v437 = vsel %vm426, %v381, 0
      %v440 = vsel %vm426, %v382, 0
      %v443 = vsel %vm426, %v383, 0
      %v446 = vsel %vm426, %v384, 0
      %v449 = vsel %vm426, %v385, 0
      %v452 = vsel %vm426, %v418, 0
      %v455 = vsel %vm426, %v419, 0
      %v458 = vsel %vm426, %v420, 0
      %v461 = vsel %vm426, %v421, 0
      %v464 = vsel %vm426, %v422, 0
      %v467 = vsel %vm426, %v423, 0
      %v470 = vsel %vm426, %v424, 0
      %v473 = vsel %vm426, %v425, 0
      %475 = vmatpush.bf16.xpose.msra.mxu0 %v473
      %476 = vmatpush.bf16.xpose.msra.mxu0 %v470
      %477 = vmatpush.bf16.xpose.msra.mxu0 %v467
      %478 = vmatpush.bf16.xpose.msra.mxu0 %v464
      %479 = vmatpush.bf16.xpose.msra.mxu0 %v461
      %480 = vmatpush.bf16.xpose.msra.mxu0 %v458
      %481 = vmatpush.bf16.xpose.msra.mxu0 %v455
      %482 = vmatpush.bf16.xpose.msra.mxu0 %v452
      %483 = vmatmul.bf16.gmra.mxu0 %v428
      %v484 = vpop.f32.mrf.mxu0
      %v485 = vadd.f32 0.0, %v484
      %v486 = vpop.f32.mrf.mxu0
      %v487 = vadd.f32 0.0, %v486
      %488 = vmatmul.bf16.gmra.mxu0 %v431
      %v489 = vpop.f32.mrf.mxu0
      %v490 = vadd.f32 0.0, %v489
      %v491 = vpop.f32.mrf.mxu0
      %v492 = vadd.f32 0.0, %v491
      %493 = vmatmul.bf16.gmra.mxu0 %v434
      %v494 = vpop.f32.mrf.mxu0
      %v495 = vadd.f32 0.0, %v494
      %v496 = vpop.f32.mrf.mxu0
      %v497 = vadd.f32 0.0, %v496
      %498 = vmatmul.bf16.gmra.mxu0 %v437
      %v499 = vpop.f32.mrf.mxu0
      %v500 = vadd.f32 0.0, %v499
      %v501 = vpop.f32.mrf.mxu0
      %v502 = vadd.f32 0.0, %v501
      %503 = vmatmul.bf16.gmra.mxu0 %v440
      %v504 = vpop.f32.mrf.mxu0
      %v505 = vadd.f32 0.0, %v504
      %v506 = vpop.f32.mrf.mxu0
      %v507 = vadd.f32 0.0, %v506
      %508 = vmatmul.bf16.gmra.mxu0 %v443
      %v509 = vpop.f32.mrf.mxu0
      %v510 = vadd.f32 0.0, %v509
      %v511 = vpop.f32.mrf.mxu0
      %v512 = vadd.f32 0.0, %v511
      %513 = vmatmul.bf16.gmra.mxu0 %v446
      %v514 = vpop.f32.mrf.mxu0
      %v515 = vadd.f32 0.0, %v514
      %v516 = vpop.f32.mrf.mxu0
      %v517 = vadd.f32 0.0, %v516
      %518 = vmatmul.bf16.gmra.mxu0 %v449
      %v519 = vpop.f32.mrf.mxu0
      %v520 = vadd.f32 0.0, %v519
      %v521 = vpop.f32.mrf.mxu0
      %v522 = vadd.f32 0.0, %v521
      %523 = vdwg.mxu0
      %524 = vmax.xlane.f32.xlu0 %v485
      %v525 = vpop.xlane.xlu0 %524
      %526 = vmax.xlane.f32.xlu0 %v487
      %v527 = vpop.xlane.xlu0 %526
      %528 = vmax.xlane.f32.xlu0 %v490
      %v529 = vpop.xlane.xlu0 %528
      %530 = vmax.xlane.f32.xlu0 %v492
      %v531 = vpop.xlane.xlu0 %530
      %532 = vmax.xlane.f32.xlu0 %v495
      %v533 = vpop.xlane.xlu0 %532
      %534 = vmax.xlane.f32.xlu0 %v497
      %v535 = vpop.xlane.xlu0 %534
      %536 = vmax.xlane.f32.xlu0 %v500
      %v537 = vpop.xlane.xlu0 %536
      %538 = vmax.xlane.f32.xlu0 %v502
      %v539 = vpop.xlane.xlu0 %538
      %540 = vmax.xlane.f32.xlu0 %v505
      %v541 = vpop.xlane.xlu0 %540
      %542 = vmax.xlane.f32.xlu0 %v507
      %v543 = vpop.xlane.xlu0 %542
      %544 = vmax.xlane.f32.xlu0 %v510
      %v545 = vpop.xlane.xlu0 %544
      %546 = vmax.xlane.f32.xlu0 %v512
      %v547 = vpop.xlane.xlu0 %546
      %548 = vmax.xlane.f32.xlu0 %v515
      %v549 = vpop.xlane.xlu0 %548
      %550 = vmax.xlane.f32.xlu0 %v517
      %v551 = vpop.xlane.xlu0 %550
      %552 = vmax.xlane.f32.xlu0 %v520
      %v553 = vpop.xlane.xlu0 %552
      %554 = vmax.xlane.f32.xlu0 %v522
      %v555 = vpop.xlane.xlu0 %554
      %556 = vmax.index.xlane.f32.xlu0 %v485
      %v557 = vpop.xlane.xlu0 %556
      %558 = vmax.index.xlane.f32.xlu0 %v487
      %v559 = vpop.xlane.xlu0 %558
      %560 = vmax.index.xlane.f32.xlu0 %v490
      %v561 = vpop.xlane.xlu0 %560
      %562 = vmax.index.xlane.f32.xlu0 %v492
      %v563 = vpop.xlane.xlu0 %562
      %564 = vmax.index.xlane.f32.xlu0 %v495
      %v565 = vpop.xlane.xlu0 %564
      %566 = vmax.index.xlane.f32.xlu0 %v497
      %v567 = vpop.xlane.xlu0 %566
      %568 = vmax.index.xlane.f32.xlu0 %v500
      %v569 = vpop.xlane.xlu0 %568
      %570 = vmax.index.xlane.f32.xlu0 %v502
      %v571 = vpop.xlane.xlu0 %570
      %572 = vmax.index.xlane.f32.xlu0 %v505
      %v573 = vpop.xlane.xlu0 %572
      %574 = vmax.index.xlane.f32.xlu0 %v507
      %v575 = vpop.xlane.xlu0 %574
      %576 = vmax.index.xlane.f32.xlu0 %v510
      %v577 = vpop.xlane.xlu0 %576
      %578 = vmax.index.xlane.f32.xlu0 %v512
      %v579 = vpop.xlane.xlu0 %578
      %580 = vmax.index.xlane.f32.xlu0 %v515
      %v581 = vpop.xlane.xlu0 %580
      %582 = vmax.index.xlane.f32.xlu0 %v517
      %v583 = vpop.xlane.xlu0 %582
      %584 = vmax.index.xlane.f32.xlu0 %v520
      %v585 = vpop.xlane.xlu0 %584
      %586 = vmax.index.xlane.f32.xlu0 %v522
      %v587 = vpop.xlane.xlu0 %586
      %v588 = vld [vmem:[#allocation3] sm:$0xff]
      %v589 = vld [vmem:[#allocation3 + $0x8] sm:$0xff]
      %v590 = vld [vmem:[#allocation3 + $0x10] sm:$0xff]
      %v591 = vld [vmem:[#allocation3 + $0x18] sm:$0xff]
      %v592 = vld [vmem:[#allocation3 + $0x20] sm:$0xff]
      %v593 = vld [vmem:[#allocation3 + $0x28] sm:$0xff]
      %v594 = vld [vmem:[#allocation3 + $0x30] sm:$0xff]
      %v595 = vld [vmem:[#allocation3 + $0x38] sm:$0xff]
      %v596 = vld [vmem:[#allocation3 + $0x40] sm:$0xff]
      %v597 = vld [vmem:[#allocation3 + $0x48] sm:$0xff]
      %v598 = vld [vmem:[#allocation3 + $0x50] sm:$0xff]
      %v599 = vld [vmem:[#allocation3 + $0x58] sm:$0xff]
      %v600 = vld [vmem:[#allocation3 + $0x60] sm:$0xff]
      %v601 = vld [vmem:[#allocation3 + $0x68] sm:$0xff]
      %v602 = vld [vmem:[#allocation3 + $0x70] sm:$0xff]
      %v603 = vld [vmem:[#allocation3 + $0x78] sm:$0xff]
      %vm604 = vcmp.gt.f32.partialorder %v525, %v588
      %vm605 = vcmp.gt.f32.partialorder %v527, %v589
      %vm606 = vcmp.gt.f32.partialorder %v529, %v590
      %vm607 = vcmp.gt.f32.partialorder %v531, %v591
      %vm608 = vcmp.gt.f32.partialorder %v533, %v592
      %vm609 = vcmp.gt.f32.partialorder %v535, %v593
      %vm610 = vcmp.gt.f32.partialorder %v537, %v594
      %vm611 = vcmp.gt.f32.partialorder %v539, %v595
      %vm612 = vcmp.gt.f32.partialorder %v541, %v596
      %vm613 = vcmp.gt.f32.partialorder %v543, %v597
      %vm614 = vcmp.gt.f32.partialorder %v545, %v598
      %vm615 = vcmp.gt.f32.partialorder %v547, %v599
      %vm616 = vcmp.gt.f32.partialorder %v549, %v600
      %vm617 = vcmp.gt.f32.partialorder %v551, %v601
      %vm618 = vcmp.gt.f32.partialorder %v553, %v602
      %vm619 = vcmp.gt.f32.partialorder %v555, %v603
      %v620 = vsel %vm604, %v525, %v588
      %v621 = vsel %vm605, %v527, %v589
      %v622 = vsel %vm606, %v529, %v590
      %v623 = vsel %vm607, %v531, %v591
      %v624 = vsel %vm608, %v533, %v592
      %v625 = vsel %vm609, %v535, %v593
      %v626 = vsel %vm610, %v537, %v594
      %v627 = vsel %vm611, %v539, %v595
      %v628 = vsel %vm612, %v541, %v596
      %v629 = vsel %vm613, %v543, %v597
      %v630 = vsel %vm614, %v545, %v598
      %v631 = vsel %vm615, %v547, %v599
      %v632 = vsel %vm616, %v549, %v600
      %v633 = vsel %vm617, %v551, %v601
      %v634 = vsel %vm618, %v553, %v602
      %v635 = vsel %vm619, %v555, %v603
      %vm636 = vcmask 7168
      %637 = vst.msk [vmem:[#allocation3] sm:$0xff] %vm636, %v620
      %638 = vst.msk [vmem:[#allocation3 + $0x8] sm:$0xff] %vm636, %v621
      %639 = vst.msk [vmem:[#allocation3 + $0x10] sm:$0xff] %vm636, %v622
      %640 = vst.msk [vmem:[#allocation3 + $0x18] sm:$0xff] %vm636, %v623
      %641 = vst.msk [vmem:[#allocation3 + $0x20] sm:$0xff] %vm636, %v624
      %642 = vst.msk [vmem:[#allocation3 + $0x28] sm:$0xff] %vm636, %v625
      %643 = vst.msk [vmem:[#allocation3 + $0x30] sm:$0xff] %vm636, %v626
      %644 = vst.msk [vmem:[#allocation3 + $0x38] sm:$0xff] %vm636, %v627
      %645 = vst.msk [vmem:[#allocation3 + $0x40] sm:$0xff] %vm636, %v628
      %646 = vst.msk [vmem:[#allocation3 + $0x48] sm:$0xff] %vm636, %v629
      %647 = vst.msk [vmem:[#allocation3 + $0x50] sm:$0xff] %vm636, %v630
      %648 = vst.msk [vmem:[#allocation3 + $0x58] sm:$0xff] %vm636, %v631
      %649 = vst.msk [vmem:[#allocation3 + $0x60] sm:$0xff] %vm636, %v632
      %650 = vst.msk [vmem:[#allocation3 + $0x68] sm:$0xff] %vm636, %v633
      %651 = vst.msk [vmem:[#allocation3 + $0x70] sm:$0xff] %vm636, %v634
      %652 = vst.msk [vmem:[#allocation3 + $0x78] sm:$0xff] %vm636, %v635
      %s653 = smul.u32 %s20, 128
      %v654 = vstv %s653
      %v655 = vadd.s32 %v557, %v654
      %v656 = vadd.s32 %v559, %v654
      %v657 = vadd.s32 %v561, %v654
      %v658 = vadd.s32 %v563, %v654
      %v659 = vadd.s32 %v565, %v654
      %v660 = vadd.s32 %v567, %v654
      %v661 = vadd.s32 %v569, %v654
      %v662 = vadd.s32 %v571, %v654
      %v663 = vadd.s32 %v573, %v654
      %v664 = vadd.s32 %v575, %v654
      %v665 = vadd.s32 %v577, %v654
      %v666 = vadd.s32 %v579, %v654
      %v667 = vadd.s32 %v581, %v654
      %v668 = vadd.s32 %v583, %v654
      %v669 = vadd.s32 %v585, %v654
      %v670 = vadd.s32 %v587, %v654
      %v671 = vld [vmem:[#allocation4] sm:$0xff]
      %v672 = vld [vmem:[#allocation4 + $0x8] sm:$0xff]
      %v673 = vld [vmem:[#allocation4 + $0x10] sm:$0xff]
      %v674 = vld [vmem:[#allocation4 + $0x18] sm:$0xff]
      %v675 = vld [vmem:[#allocation4 + $0x20] sm:$0xff]
      %v676 = vld [vmem:[#allocation4 + $0x28] sm:$0xff]
      %v677 = vld [vmem:[#allocation4 + $0x30] sm:$0xff]
      %v678 = vld [vmem:[#allocation4 + $0x38] sm:$0xff]
      %v679 = vld [vmem:[#allocation4 + $0x40] sm:$0xff]
      %v680 = vld [vmem:[#allocation4 + $0x48] sm:$0xff]
      %v681 = vld [vmem:[#allocation4 + $0x50] sm:$0xff]
      %v682 = vld [vmem:[#allocation4 + $0x58] sm:$0xff]
      %v683 = vld [vmem:[#allocation4 + $0x60] sm:$0xff]
      %v684 = vld [vmem:[#allocation4 + $0x68] sm:$0xff]
      %v685 = vld [vmem:[#allocation4 + $0x70] sm:$0xff]
      %v686 = vld [vmem:[#allocation4 + $0x78] sm:$0xff]
      %v687 = vsel %vm604, %v655, %v671
      %v688 = vsel %vm605, %v656, %v672
      %v689 = vsel %vm606, %v657, %v673
      %v690 = vsel %vm607, %v658, %v674
      %v691 = vsel %vm608, %v659, %v675
      %v692 = vsel %vm609, %v660, %v676
      %v693 = vsel %vm610, %v661, %v677
      %v694 = vsel %vm611, %v662, %v678
      %v695 = vsel %vm612, %v663, %v679
      %v696 = vsel %vm613, %v664, %v680
      %v697 = vsel %vm614, %v665, %v681
      %v698 = vsel %vm615, %v666, %v682
      %v699 = vsel %vm616, %v667, %v683
      %v700 = vsel %vm617, %v668, %v684
      %v701 = vsel %vm618, %v669, %v685
      %v702 = vsel %vm619, %v670, %v686
      %703 = vst.msk [vmem:[#allocation4] sm:$0xff] %vm636, %v687
      %704 = vst.msk [vmem:[#allocation4 + $0x8] sm:$0xff] %vm636, %v688
      %705 = vst.msk [vmem:[#allocation4 + $0x10] sm:$0xff] %vm636, %v689
      %706 = vst.msk [vmem:[#allocation4 + $0x18] sm:$0xff] %vm636, %v690
      %707 = vst.msk [vmem:[#allocation4 + $0x20] sm:$0xff] %vm636, %v691
      %708 = vst.msk [vmem:[#allocation4 + $0x28] sm:$0xff] %vm636, %v692
      %709 = vst.msk [vmem:[#allocation4 + $0x30] sm:$0xff] %vm636, %v693
      %710 = vst.msk [vmem:[#allocation4 + $0x38] sm:$0xff] %vm636, %v694
      %711 = vst.msk [vmem:[#allocation4 + $0x40] sm:$0xff] %vm636, %v695
      %712 = vst.msk [vmem:[#allocation4 + $0x48] sm:$0xff] %vm636, %v696
      %713 = vst.msk [vmem:[#allocation4 + $0x50] sm:$0xff] %vm636, %v697
      %714 = vst.msk [vmem:[#allocation4 + $0x58] sm:$0xff] %vm636, %v698
      %715 = vst.msk [vmem:[#allocation4 + $0x60] sm:$0xff] %vm636, %v699
      %716 = vst.msk [vmem:[#allocation4 + $0x68] sm:$0xff] %vm636, %v700
      %717 = vst.msk [vmem:[#allocation4 + $0x70] sm:$0xff] %vm636, %v701
      %718 = vst.msk [vmem:[#allocation4 + $0x78] sm:$0xff] %vm636, %v702
      // Predicated region
      $region33: #{vq_forward.1} parent=27 // pred_check
        %p719 = pneg %p212
      $region34: #{vq_forward.1} parent=27 // pred_check_branch
        %721 = sbr.rel (%p719) target = $region36
      $region35: #{vq_forward.1} parent=27 // pred_region
        %v722 = vld [vmem:[#allocation4] sm:$0xff]
        %v723 = vld [vmem:[#allocation4 + $0x8] sm:$0xff]
        %v724 = vld [vmem:[#allocation4 + $0x10] sm:$0xff]
        %v725 = vld [vmem:[#allocation4 + $0x18] sm:$0xff]
        %v726 = vld [vmem:[#allocation4 + $0x20] sm:$0xff]
        %v727 = vld [vmem:[#allocation4 + $0x28] sm:$0xff]
        %v728 = vld [vmem:[#allocation4 + $0x30] sm:$0xff]
        %v729 = vld [vmem:[#allocation4 + $0x38] sm:$0xff]
        %v730 = vld [vmem:[#allocation4 + $0x40] sm:$0xff]
        %v731 = vld [vmem:[#allocation4 + $0x48] sm:$0xff]
        %v732 = vld [vmem:[#allocation4 + $0x50] sm:$0xff]
        %v733 = vld [vmem:[#allocation4 + $0x58] sm:$0xff]
        %v734 = vld [vmem:[#allocation4 + $0x60] sm:$0xff]
        %v735 = vld [vmem:[#allocation4 + $0x68] sm:$0xff]
        %v736 = vld [vmem:[#allocation4 + $0x70] sm:$0xff]
        %v737 = vld [vmem:[#allocation4 + $0x78] sm:$0xff]
        %738 = vset.pattern.permute.xlu0 0
        %739 = vperm.xlu0 %738, %v722
        %v740 = vpop.permute.xlu0 %739
        %741 = vset.pattern.permute.xlu0 0
        %742 = vperm.xlu0 %741, %v723
        %v743 = vpop.permute.xlu0 %742
        %744 = vset.pattern.permute.xlu0 0
        %745 = vperm.xlu0 %744, %v724
        %v746 = vpop.permute.xlu0 %745
        %747 = vset.pattern.permute.xlu0 0
        %748 = vperm.xlu0 %747, %v725
        %v749 = vpop.permute.xlu0 %748
        %750 = vset.pattern.permute.xlu0 0
        %751 = vperm.xlu0 %750, %v726
        %v752 = vpop.permute.xlu0 %751
        %753 = vset.pattern.permute.xlu0 0
        %754 = vperm.xlu0 %753, %v727
        %v755 = vpop.permute.xlu0 %754
        %756 = vset.pattern.permute.xlu0 0
        %757 = vperm.xlu0 %756, %v728
        %v758 = vpop.permute.xlu0 %757
        %759 = vset.pattern.permute.xlu0 0
        %760 = vperm.xlu0 %759, %v729
        %v761 = vpop.permute.xlu0 %760
        %762 = vset.pattern.permute.xlu0 0
        %763 = vperm.xlu0 %762, %v730
        %v764 = vpop.permute.xlu0 %763
        %765 = vset.pattern.permute.xlu0 0
        %766 = vperm.xlu0 %765, %v731
        %v767 = vpop.permute.xlu0 %766
        %768 = vset.pattern.permute.xlu0 0
        %769 = vperm.xlu0 %768, %v732
        %v770 = vpop.permute.xlu0 %769
        %771 = vset.pattern.permute.xlu0 0
        %772 = vperm.xlu0 %771, %v733
        %v773 = vpop.permute.xlu0 %772
        %774 = vset.pattern.permute.xlu0 0
        %775 = vperm.xlu0 %774, %v734
        %v776 = vpop.permute.xlu0 %775
        %777 = vset.pattern.permute.xlu0 0
        %778 = vperm.xlu0 %777, %v735
        %v779 = vpop.permute.xlu0 %778
        %780 = vset.pattern.permute.xlu0 0
        %781 = vperm.xlu0 %780, %v736
        %v782 = vpop.permute.xlu0 %781
        %783 = vset.pattern.permute.xlu0 0
        %784 = vperm.xlu0 %783, %v737
        %v785 = vpop.permute.xlu0 %784
        %v786 = vlaneseq
        %v787 = vand.u32 %v786, 127
        %v788 = vperm.slane %v740, %v787
        %v789 = vadd.s32 %v787, 4294967288
        %v790 = vperm.slane %v743, %v789
        %vm791 = vcmask 130112
        %v792 = vsel %vm791, %v790, %v788
        %v793 = vadd.s32 %v787, 4294967280
        %v794 = vperm.slane %v746, %v793
        %vm795 = vcmask 195712
        %v796 = vsel %vm795, %v794, %v792
        %v797 = vadd.s32 %v787, 4294967272
        %v798 = vperm.slane %v749, %v797
        %vm799 = vcmask 261312
        %v800 = vsel %vm799, %v798, %v796
        %v801 = vadd.s32 %v787, 4294967264
        %v802 = vperm.slane %v752, %v801
        %vm803 = vcmask 326912
        %v804 = vsel %vm803, %v802, %v800
        %v805 = vadd.s32 %v787, 4294967256
        %v806 = vperm.slane %v755, %v805
        %vm807 = vcmask 392512
        %v808 = vsel %vm807, %v806, %v804
        %v809 = vadd.s32 %v787, 4294967248
        %v810 = vperm.slane %v758, %v809
        %vm811 = vcmask 458112
        %v812 = vsel %vm811, %v810, %v808
        %v813 = vadd.s32 %v787, 4294967240
        %v814 = vperm.slane %v761, %v813
        %vm815 = vcmask 523712
        %v816 = vsel %vm815, %v814, %v812
        %v817 = vadd.s32 %v787, 4294967232
        %v818 = vperm.slane %v764, %v817
        %vm819 = vcmask 589312
        %v820 = vsel %vm819, %v818, %v816
        %v821 = vadd.s32 %v787, 4294967224
        %v822 = vperm.slane %v767, %v821
        %vm823 = vcmask 654912
        %v824 = vsel %vm823, %v822, %v820
        %v825 = vadd.s32 %v787, 4294967216
        %v826 = vperm.slane %v770, %v825
        %vm827 = vcmask 720512
        %v828 = vsel %vm827, %v826, %v824
        %v829 = vadd.s32 %v787, 4294967208
        %v830 = vperm.slane %v773, %v829
        %vm831 = vcmask 786112
        %v832 = vsel %vm831, %v830, %v828
        %v833 = vadd.s32 %v787, 4294967200
        %v834 = vperm.slane %v776, %v833
        %vm835 = vcmask 851712
        %v836 = vsel %vm835, %v834, %v832
        %v837 = vadd.s32 %v787, 4294967192
        %v838 = vperm.slane %v779, %v837
        %vm839 = vcmask 917312
        %v840 = vsel %vm839, %v838, %v836
        %v841 = vadd.s32 %v787, 4294967184
        %v842 = vperm.slane %v782, %v841
        %vm843 = vcmask 982912
        %v844 = vsel %vm843, %v842, %v840
        %v845 = vadd.s32 %v787, 4294967176
        %v846 = vperm.slane %v785, %v845
        %vm847 = vcmask 1048512
        %v848 = vsel %vm847, %v846, %v844
        %849 = vst [vmem:[%s208] sm:$0x1] %v848
        %v850 = vld [vmem:[%s198] sm:$0xff]
        %v851 = vld [vmem:[%s198 + $0x8] sm:$0xff]
        %v852 = vld [vmem:[%s198 + $0x10] sm:$0xff]
        %v853 = vld [vmem:[%s198 + $0x18] sm:$0xff]
        %v854 = vmul.f32 %v850, %v850
        %v855 = vmul.f32 %v851, %v851
        %v856 = vmul.f32 %v852, %v852
        %v857 = vmul.f32 %v853, %v853
        %858 = vadd.xlane.f32.xlu0 %v854
        %v859 = vpop.xlane.xlu0 %858
        %860 = vadd.xlane.f32.xlu0 %v855
        %v861 = vpop.xlane.xlu0 %860
        %862 = vadd.xlane.f32.xlu0 %v856
        %v863 = vpop.xlane.xlu0 %862
        %864 = vadd.xlane.f32.xlu0 %v857
        %v865 = vpop.xlane.xlu0 %864
        %v866 = vadd.f32 %v859, %v861
        %v867 = vadd.f32 %v866, %v863
        %v868 = vadd.f32 %v867, %v865
        %v869 = vrot.slane %v868, 4
        %v870 = vadd.f32 %v868, %v869
        %v871 = vrot.slane %v870, 2
        %v872 = vadd.f32 %v870, %v871
        %v873 = vrot.slane %v872, 1
        %v874 = vadd.f32 %v872, %v873
        %v875 = vld [vmem:[#allocation3] sm:$0xff]
        %v876 = vld [vmem:[#allocation3 + $0x8] sm:$0xff]
        %v877 = vld [vmem:[#allocation3 + $0x10] sm:$0xff]
        %v878 = vld [vmem:[#allocation3 + $0x18] sm:$0xff]
        %v879 = vld [vmem:[#allocation3 + $0x20] sm:$0xff]
        %v880 = vld [vmem:[#allocation3 + $0x28] sm:$0xff]
        %v881 = vld [vmem:[#allocation3 + $0x30] sm:$0xff]
        %v882 = vld [vmem:[#allocation3 + $0x38] sm:$0xff]
        %v883 = vld [vmem:[#allocation3 + $0x40] sm:$0xff]
        %v884 = vld [vmem:[#allocation3 + $0x48] sm:$0xff]
        %v885 = vld [vmem:[#allocation3 + $0x50] sm:$0xff]
        %v886 = vld [vmem:[#allocation3 + $0x58] sm:$0xff]
        %v887 = vld [vmem:[#allocation3 + $0x60] sm:$0xff]
        %v888 = vld [vmem:[#allocation3 + $0x68] sm:$0xff]
        %v889 = vld [vmem:[#allocation3 + $0x70] sm:$0xff]
        %v890 = vld [vmem:[#allocation3 + $0x78] sm:$0xff]
        %v891 = vsel %vm636, %v875, 0.0
        %v892 = vsel %vm636, %v876, 0.0
        %v893 = vadd.f32 %v891, %v892
        %v894 = vsel %vm636, %v877, 0.0
        %v895 = vadd.f32 %v893, %v894
        %v896 = vsel %vm636, %v878, 0.0
        %v897 = vadd.f32 %v895, %v896
        %v898 = vsel %vm636, %v879, 0.0
        %v899 = vadd.f32 %v897, %v898
        %v900 = vsel %vm636, %v880, 0.0
        %v901 = vadd.f32 %v899, %v900
        %v902 = vsel %vm636, %v881, 0.0
        %v903 = vadd.f32 %v901, %v902
        %v904 = vsel %vm636, %v882, 0.0
        %v905 = vadd.f32 %v903, %v904
        %v906 = vsel %vm636, %v883, 0.0
        %v907 = vadd.f32 %v905, %v906
        %v908 = vsel %vm636, %v884, 0.0
        %v909 = vadd.f32 %v907, %v908
        %v910 = vsel %vm636, %v885, 0.0
        %v911 = vadd.f32 %v909, %v910
        %v912 = vsel %vm636, %v886, 0.0
        %v913 = vadd.f32 %v911, %v912
        %v914 = vsel %vm636, %v887, 0.0
        %v915 = vadd.f32 %v913, %v914
        %v916 = vsel %vm636, %v888, 0.0
        %v917 = vadd.f32 %v915, %v916
        %v918 = vsel %vm636, %v889, 0.0
        %v919 = vadd.f32 %v917, %v918
        %v920 = vsel %vm636, %v890, 0.0
        %v921 = vadd.f32 %v919, %v920
        %v922 = vrot.slane %v921, 4
        %v923 = vadd.f32 %v921, %v922
        %v924 = vrot.slane %v923, 2
        %v925 = vadd.f32 %v923, %v924
        %v926 = vrot.slane %v925, 1
        %v927 = vadd.f32 %v925, %v926
        %v928 = vadd.f32 %v874, 128.0
        %v929 = vmul.f32 %v927, 2.0
        %v930 = vsub.f32 %v928, %v929
        %932 = vset.pattern.permute.xlu0 0
        %933 = vperm.xlu0 %932, %v930
        %v934 = vpop.permute.xlu0 %933
        %936 = vst [vmem:[%s211] sm:$0x1] %v934
      $region36: #{vq_forward.1} parent=27 // pred_fallthru
        _
      %p937 = scmp.lt.s32.totalorder %s19, 7
      %s938 = scalar_select %p937, %s19, 7
      %s939 = scalar_lea.vmem %s2, %s938
      %p940 = scmp.lt.s32.totalorder %s19, 7
      %s941 = scalar_select %p940, %s19, 7
      %s942 = scalar_lea.vmem %s3, %s941
      // Predicated region
      $region37: #{vq_forward.1} parent=27 // pred_check
        %p943 = pneg %p97
      $region38: #{vq_forward.1} parent=27 // pred_check_branch
        %945 = sbr.rel (%p943) target = $region40
      $region39: #{vq_forward.1} parent=27 // pred_region
        _
      $region40: #{vq_forward.1} parent=27 // pred_fallthru
        _
      // Predicated region
      $region41: #{vq_forward.1} parent=27 // pred_check
        %p946 = pneg %p123
      $region42: #{vq_forward.1} parent=27 // pred_check_branch
        %948 = sbr.rel (%p946) target = $region44
      $region43: #{vq_forward.1} parent=27 // pred_region
        _
      $region44: #{vq_forward.1} parent=27 // pred_fallthru
        _
    $region28: #{vq_forward.1} parent=5 // pred_fallthru
      _
    %p949 = scmp.le.s32.totalorder 2, %s10
    // Predicated region
    $region45: #{vq_forward.1} parent=5 // pred_check
      %p950 = pneg %p949
    $region46: #{vq_forward.1} parent=5 // pred_check_branch
      %952 = sbr.rel (%p950) target = $region48
    $region47: #{vq_forward.1} parent=5 // pred_region
      %s953 = ssub.s32 %s10, 2
      // Predicated region
      $region49: #{vq_forward.1} parent=47 // pred_check
        %p954 = pneg %p103
      $region50: #{vq_forward.1} parent=47 // pred_check_branch
        %956 = sbr.rel (%p954) target = $region52
      $region51: #{vq_forward.1} parent=47 // pred_region
        %p957 = scmp.lt.s32.totalorder %s21, 7
        %s958 = scalar_select %p957, %s21, 7
        %s959 = scalar_lea.vmem %s2, %s958
      $region52: #{vq_forward.1} parent=47 // pred_fallthru
        _
      // Predicated region
      $region53: #{vq_forward.1} parent=47 // pred_check
        %p960 = pneg %p129
      $region54: #{vq_forward.1} parent=47 // pred_check_branch
        %962 = sbr.rel (%p960) target = $region56
      $region55: #{vq_forward.1} parent=47 // pred_region
        %p963 = scmp.lt.s32.totalorder %s21, 7
        %s964 = scalar_select %p963, %s21, 7
        %s965 = scalar_lea.vmem %s3, %s964
      $region56: #{vq_forward.1} parent=47 // pred_fallthru
        _
    $region48: #{vq_forward.1} parent=5 // pred_fallthru
      _
  $region6: #{vq_forward.1} parent=0 // loop_footer
    %s14 = sadd.s32 1, %s10
  $region7: #{vq_forward.1} parent=0 // loop_footer_branch
    %9 = sbr.rel target = $region3
  $region8: #{vq_forward.1} parent=0 // loop_exit
    _

</llo_original>
